<compile_context>
chip_gen: v6e
topology: v6e:2x2x1
jax: 0.10.0
libtpu: 0.0.40
codegen_flags: <defaults>
</compile_context>

<pallas_src>
import functools

import jax
import jax.numpy as jnp
from jax.experimental import pallas as pl
from jax.experimental.pallas import tpu as pltpu

_LANES = 128
_TILE_ROWS = 512  # sublane rows per spatial tile (multiple of 8); ~768 KiB/block f32

# Sepia 3x3 mix coefficients (match kornia).
_COEFFS = (
    (0.393, 0.769, 0.189),
    (0.349, 0.686, 0.168),
    (0.272, 0.534, 0.131),
)


def _mix(r, g, b, c):
    return c[0] * r + c[1] * g + c[2] * b


def _sepia_plain_kernel(x_ref, o_ref):
    # Block: (1, 3, TILE_ROWS, 128). Write each mixed channel directly.
    r = x_ref[0, 0].astype(jnp.float32)
    g = x_ref[0, 1].astype(jnp.float32)
    b = x_ref[0, 2].astype(jnp.float32)
    o_ref[0, 0] = _mix(r, g, b, _COEFFS[0]).astype(o_ref.dtype)
    o_ref[0, 1] = _mix(r, g, b, _COEFFS[1]).astype(o_ref.dtype)
    o_ref[0, 2] = _mix(r, g, b, _COEFFS[2]).astype(o_ref.dtype)


def _sepia_max_kernel(x_ref, max_ref, *, n_valid: int, tile_rows: int):
    # Pass 1: per-(batch, channel) max of the sepia-mixed image.
    # max_ref block (1, 3, 128) is resident across the tile ("arbitrary") axis.
    t = pl.program_id(1)

    @pl.when(t == 0)
    def _():
        max_ref[...] = jnp.full(max_ref.shape, -jnp.inf, dtype=max_ref.dtype)

    r = x_ref[0, 0].astype(jnp.float32)
    g = x_ref[0, 1].astype(jnp.float32)
    b = x_ref[0, 2].astype(jnp.float32)

    # Mask the zero-padded tail of the flattened spatial axis.
    row = jax.lax.broadcasted_iota(jnp.int32, (tile_rows, _LANES), 0)
    lane = jax.lax.broadcasted_iota(jnp.int32, (tile_rows, _LANES), 1)
    flat = (t * tile_rows + row) * _LANES + lane
    valid = flat < n_valid
    neg = jnp.float32(-jnp.inf)

    for c in range(3):
        mixed = _mix(r, g, b, _COEFFS[c])
        lane_max = jnp.max(jnp.where(valid, mixed, neg), axis=0, keepdims=True)  # (1,128)
        max_ref[:, c:c + 1, :] = jnp.maximum(max_ref[:, c:c + 1, :], lane_max[None])

    @pl.when(t == pl.num_programs(1) - 1)
    def _():
        # Collapse lanes to the per-channel scalar max, broadcast back across
        # lanes so pass 2 only needs a cheap sublane-broadcast multiply.
        m = jnp.max(max_ref[...], axis=-1, keepdims=True)  # (1, 3, 1)
        max_ref[...] = jnp.broadcast_to(m, max_ref.shape)


def _sepia_rescale_kernel(x_ref, max_ref, o_ref, *, eps: float):
    # Pass 2: recompute mix, scale by 1/(max + eps). No unnormalized writeback.
    r = x_ref[0, 0].astype(jnp.float32)
    g = x_ref[0, 1].astype(jnp.float32)
    b = x_ref[0, 2].astype(jnp.float32)
    inv = 1.0 / (max_ref[...] + eps)  # exact reciprocal on a tiny (1, 3, 128)
    o_ref[0, 0] = (_mix(r, g, b, _COEFFS[0]) * inv[0, 0]).astype(o_ref.dtype)
    o_ref[0, 1] = (_mix(r, g, b, _COEFFS[1]) * inv[0, 1]).astype(o_ref.dtype)
    o_ref[0, 2] = (_mix(r, g, b, _COEFFS[2]) * inv[0, 2]).astype(o_ref.dtype)


def sepia(x: jax.Array, rescale: bool = True, eps: float = 1e-6) -> jax.Array:
    """Apply the sepia filter. x has shape (*, 3, H, W)."""
    if x.ndim < 3 or x.shape[-3] != 3:
        raise ValueError(f"Input size must have a shape of (*, 3, H, W). Got {x.shape}")

    orig_shape = x.shape
    H, W = x.shape[-2], x.shape[-1]
    x4 = x.reshape((-1, 3, H, W))
    B = x4.shape[0]
    P = H * W

    # Lane/sublane-dense layout: flatten spatial, pad to S_pad*128 and view as
    # (B, 3, S_pad, 128). Contiguous reshape + zero pad is cheap wrapper glue.
    S = -(-P // _LANES)
    if S <= _TILE_ROWS:
        tile_rows = max(8, ((S + 7) // 8) * 8)
        num_tiles = 1
    else:
        tile_rows = _TILE_ROWS
        num_tiles = -(-S // tile_rows)
    S_pad = tile_rows * num_tiles
    P_pad = S_pad * _LANES

    x3 = x4.reshape(B, 3, P)
    if P_pad != P:
        x3 = jnp.pad(x3, ((0, 0), (0, 0), (0, P_pad - P)))
    xt = x3.reshape(B, 3, S_pad, _LANES)

    grid = (B, num_tiles)
    img_spec = pl.BlockSpec((1, 3, tile_rows, _LANES), lambda bi, ti: (bi, 0, ti, 0))
    itemsize = x.dtype.itemsize

    if not rescale:
        out = pl.pallas_call(
            _sepia_plain_kernel,
            out_shape=jax.ShapeDtypeStruct(xt.shape, x.dtype),
            grid_spec=pltpu.PrefetchScalarGridSpec(
                num_scalar_prefetch=0,
                grid=grid,
                in_specs=[img_spec],
                out_specs=img_spec,
            ),
            compiler_params=pltpu.CompilerParams(
                dimension_semantics=("parallel", "parallel")),
            cost_estimate=pl.CostEstimate(
                flops=15 * B * P,
                transcendentals=0,
                bytes_accessed=2 * 3 * B * P_pad * itemsize),
        )(xt)
    else:
        max_spec = pl.BlockSpec((1, 3, _LANES), lambda bi, ti: (bi, 0, 0))

        # Pass 1: per-(batch, channel) max of the mixed image.
        max_vals = pl.pallas_call(
            functools.partial(_sepia_max_kernel, n_valid=P, tile_rows=tile_rows),
            out_shape=jax.ShapeDtypeStruct((B, 3, _LANES), jnp.float32),
            grid_spec=pltpu.PrefetchScalarGridSpec(
                num_scalar_prefetch=0,
                grid=grid,
                in_specs=[img_spec],
                out_specs=max_spec,
            ),
            compiler_params=pltpu.CompilerParams(
                dimension_semantics=("parallel", "arbitrary")),
            cost_estimate=pl.CostEstimate(
                flops=18 * B * P,
                transcendentals=0,
                bytes_accessed=3 * B * P_pad * itemsize),
        )(xt)

        # Pass 2: recompute mix and scale. Fully parallel grid.
        out = pl.pallas_call(
            functools.partial(_sepia_rescale_kernel, eps=eps),
            out_shape=jax.ShapeDtypeStruct(xt.shape, x.dtype),
            grid_spec=pltpu.PrefetchScalarGridSpec(
                num_scalar_prefetch=0,
                grid=grid,
                in_specs=[img_spec, max_spec],
                out_specs=img_spec,
            ),
            compiler_params=pltpu.CompilerParams(
                dimension_semantics=("parallel", "parallel")),
            cost_estimate=pl.CostEstimate(
                flops=18 * B * P,
                transcendentals=0,
                bytes_accessed=2 * 3 * B * P_pad * itemsize),
        )(xt, max_vals)

    return out.reshape(B, 3, P_pad)[:, :, :P].reshape(orig_shape)


class Sepia:
    """Mirror of kornia.color.Sepia (no learnable parameters)."""

    def __init__(self, rescale: bool = True, eps: float = 1e-6) -> None:
        self.rescale = rescale
        self.eps = eps

    def __repr__(self) -> str:
        return self.__class__.__name__ + f"(rescale={self.rescale}, eps={self.eps})"

    def __call__(self, x: jax.Array) -> jax.Array:
        return sepia(x, rescale=self.rescale, eps=self.eps)


def _sepia_reference(x, rescale=True, eps=1e-6):
    """Pure-JAX reference for correctness check."""
    r = x[..., 0, :, :]
    g = x[..., 1, :, :]
    b = x[..., 2, :, :]
    r_out = 0.393 * r + 0.769 * g + 0.189 * b
    g_out = 0.349 * r + 0.686 * g + 0.168 * b
    b_out = 0.272 * r + 0.534 * g + 0.131 * b
    out = jnp.stack([r_out, g_out, b_out], axis=-3)
    if rescale:
        max_vals = out.max(axis=-1).max(axis=-1)
        out = out / (max_vals[..., None, None] + eps)
    return out


if __name__ == "__main__":
    key = jax.random.PRNGKey(0)
    k1, k2 = jax.random.split(key)

    # Small NCHW batch, uniform image-like values.
    x = jax.random.uniform(k1, (2, 3, 16, 16), dtype=jnp.float32)

    y = jax.block_until_ready(Sepia(rescale=True, eps=1e-6)(x))
    y_ref = _sepia_reference(x, rescale=True, eps=1e-6)
    assert y.shape == x.shape, (y.shape, x.shape)
    assert jnp.allclose(y, y_ref, atol=1e-5, rtol=1e-5), "mismatch (rescale=True)"

    y2 = jax.block_until_ready(Sepia(rescale=False)(x))
    y2_ref = _sepia_reference(x, rescale=False)
    assert jnp.allclose(y2, y2_ref, atol=1e-5, rtol=1e-5), "mismatch (rescale=False)"

    # Odd spatial size, no batch dim, signed values: exercises the padded-tail
    # masking in the max pass and the flattened-spatial layout.
    x3 = jax.random.normal(k2, (3, 5, 7), dtype=jnp.float32)
    y3 = jax.block_until_ready(sepia(x3, rescale=True))
    y3_ref = _sepia_reference(x3, rescale=True)
    assert y3.shape == x3.shape
    assert jnp.allclose(y3, y3_ref, atol=1e-5, rtol=1e-5), "mismatch (odd shape)"

    print("KERNEL_OK")
</pallas_src>

<mosaic_0001>
module attributes {stable_mosaic.version = 11 : i64} {
  func.func @_sepia_max_kernel(%arg0: i32, %arg1: i32, %arg2: memref<1x3x8x128xf32, #tpu.memory_space<vmem>>, %arg3: memref<1x3x128xf32, #tpu.memory_space<vmem>>) attributes {dimension_semantics = [#tpu.dimension_semantics<parallel>, #tpu.dimension_semantics<arbitrary>], iteration_bounds = array<i64: 2, 1>, scalar_prefetch = 0 : i64, scratch_operands = 0 : i64, tpu.core_type = #tpu.core_type<tc>, window_params = [{transform_indices = @transform_0, window_bounds = array<i64: 1, 3, 8, 128>}, {transform_indices = @transform_1, window_bounds = array<i64: 1, 3, 128>}]} {
    %c0_i32 = arith.constant 0 : i32
    %0 = arith.cmpi eq, %arg1, %c0_i32 : i32
    %1 = arith.extui %0 : i1 to i32
    %c0_i32_0 = arith.constant 0 : i32
    %2 = arith.cmpi ne, %1, %c0_i32_0 : i32
    scf.if %2 {
      %cst_44 = arith.constant 0xFF800000 : f32
      %70 = vector.broadcast %cst_44 : f32 to vector<1x3x128xf32>
      %c0_45 = arith.constant 0 : index
      %c0_46 = arith.constant 0 : index
      %c0_47 = arith.constant 0 : index
      %71 = vector.load %arg3[%c0_45, %c0_46, %c0_47] : memref<1x3x128xf32, #tpu.memory_space<vmem>>, vector<1x3x128xf32>
      tpu.vector_store %arg3[%c0_45, %c0_46, %c0_47], %70 {strides = array<i32>} : memref<1x3x128xf32, #tpu.memory_space<vmem>>, vector<1x3x128xf32>,
    } else {
    }
    %c0 = arith.constant 0 : index
    %c0_1 = arith.constant 0 : index
    %c0_2 = arith.constant 0 : index
    %c0_3 = arith.constant 0 : index
    %3 = vector.load %arg2[%c0, %c0_1, %c0_2, %c0_3] : memref<1x3x8x128xf32, #tpu.memory_space<vmem>>, vector<1x1x8x128xf32>
    %4 = vector.shape_cast %3 : vector<1x1x8x128xf32> to vector<8x128xf32>
    %c0_4 = arith.constant 0 : index
    %c1 = arith.constant 1 : index
    %c0_5 = arith.constant 0 : index
    %c0_6 = arith.constant 0 : index
    %5 = vector.load %arg2[%c0_4, %c1, %c0_5, %c0_6] : memref<1x3x8x128xf32, #tpu.memory_space<vmem>>, vector<1x1x8x128xf32>
    %6 = vector.shape_cast %5 : vector<1x1x8x128xf32> to vector<8x128xf32>
    %c0_7 = arith.constant 0 : index
    %c2 = arith.constant 2 : index
    %c0_8 = arith.constant 0 : index
    %c0_9 = arith.constant 0 : index
    %7 = vector.load %arg2[%c0_7, %c2, %c0_8, %c0_9] : memref<1x3x8x128xf32, #tpu.memory_space<vmem>>, vector<1x1x8x128xf32>
    %8 = vector.shape_cast %7 : vector<1x1x8x128xf32> to vector<8x128xf32>
    %9 = tpu.iota {dimensions = array<i32: 0>} : vector<8x128xi32>
    %10 = tpu.iota {dimensions = array<i32: 1>} : vector<8x128xi32>
    %c8_i32 = arith.constant 8 : i32
    %11 = arith.muli %arg1, %c8_i32 : i32
    %12 = vector.broadcast %11 : i32 to vector<8x128xi32>
    %13 = arith.addi %12, %9 : vector<8x128xi32>
    %c128_i32 = arith.constant 128 : i32
    %14 = vector.broadcast %c128_i32 : i32 to vector<8x128xi32>
    %15 = arith.muli %13, %14 : vector<8x128xi32>
    %16 = arith.addi %15, %10 : vector<8x128xi32>
    %c256_i32 = arith.constant 256 : i32
    %17 = vector.broadcast %c256_i32 : i32 to vector<8x128xi32>
    %18 = arith.cmpi slt, %16, %17 : vector<8x128xi32>
    %cst = arith.constant 3.930000e-01 : f32
    %19 = vector.broadcast %cst : f32 to vector<8x128xf32>
    %20 = arith.mulf %19, %4 : vector<8x128xf32>
    %cst_10 = arith.constant 0.768999993 : f32
    %21 = vector.broadcast %cst_10 : f32 to vector<8x128xf32>
    %22 = arith.mulf %21, %6 : vector<8x128xf32>
    %23 = arith.addf %20, %22 : vector<8x128xf32>
    %cst_11 = arith.constant 1.890000e-01 : f32
    %24 = vector.broadcast %cst_11 : f32 to vector<8x128xf32>
    %25 = arith.mulf %24, %8 : vector<8x128xf32>
    %26 = arith.addf %23, %25 : vector<8x128xf32>
    %cst_12 = arith.constant 0xFF800000 : f32
    %27 = vector.broadcast %cst_12 : f32 to vector<8x128xf32>
    %28 = arith.select %18, %26, %27 : vector<8x128xi1>, vector<8x128xf32>
    %cst_13 = arith.constant dense<0xFF800000> : vector<128xf32>
    %29 = vector.multi_reduction <maximumf>, %28, %cst_13 [0] : vector<8x128xf32> to vector<128xf32>
    %30 = vector.shape_cast %29 : vector<128xf32> to vector<1x128xf32>
    %c0_14 = arith.constant 0 : index
    %c0_15 = arith.constant 0 : index
    %c0_16 = arith.constant 0 : index
    %31 = vector.load %arg3[%c0_14, %c0_15, %c0_16] : memref<1x3x128xf32, #tpu.memory_space<vmem>>, vector<1x1x128xf32>
    %32 = vector.shape_cast %30 : vector<1x128xf32> to vector<1x1x128xf32>
    %33 = arith.maximumf %31, %32 : vector<1x1x128xf32>
    %c0_17 = arith.constant 0 : index
    %c0_18 = arith.constant 0 : index
    %c0_19 = arith.constant 0 : index
    %34 = vector.load %arg3[%c0_17, %c0_18, %c0_19] : memref<1x3x128xf32, #tpu.memory_space<vmem>>, vector<1x1x128xf32>
    tpu.vector_store %arg3[%c0_17, %c0_18, %c0_19], %33 {strides = array<i32>} : memref<1x3x128xf32, #tpu.memory_space<vmem>>, vector<1x1x128xf32>,
    %cst_20 = arith.constant 3.490000e-01 : f32
    %35 = vector.broadcast %cst_20 : f32 to vector<8x128xf32>
    %36 = arith.mulf %35, %4 : vector<8x128xf32>
    %cst_21 = arith.constant 6.860000e-01 : f32
    %37 = vector.broadcast %cst_21 : f32 to vector<8x128xf32>
    %38 = arith.mulf %37, %6 : vector<8x128xf32>
    %39 = arith.addf %36, %38 : vector<8x128xf32>
    %cst_22 = arith.constant 1.680000e-01 : f32
    %40 = vector.broadcast %cst_22 : f32 to vector<8x128xf32>
    %41 = arith.mulf %40, %8 : vector<8x128xf32>
    %42 = arith.addf %39, %41 : vector<8x128xf32>
    %cst_23 = arith.constant 0xFF800000 : f32
    %43 = vector.broadcast %cst_23 : f32 to vector<8x128xf32>
    %44 = arith.select %18, %42, %43 : vector<8x128xi1>, vector<8x128xf32>
    %cst_24 = arith.constant dense<0xFF800000> : vector<128xf32>
    %45 = vector.multi_reduction <maximumf>, %44, %cst_24 [0] : vector<8x128xf32> to vector<128xf32>
    %46 = vector.shape_cast %45 : vector<128xf32> to vector<1x128xf32>
    %c0_25 = arith.constant 0 : index
    %c1_26 = arith.constant 1 : index
    %c0_27 = arith.constant 0 : index
    %47 = vector.load %arg3[%c0_25, %c1_26, %c0_27] : memref<1x3x128xf32, #tpu.memory_space<vmem>>, vector<1x1x128xf32>
    %48 = vector.shape_cast %46 : vector<1x128xf32> to vector<1x1x128xf32>
    %49 = arith.maximumf %47, %48 : vector<1x1x128xf32>
    %c0_28 = arith.constant 0 : index
    %c1_29 = arith.constant 1 : index
    %c0_30 = arith.constant 0 : index
    %50 = vector.load %arg3[%c0_28, %c1_29, %c0_30] : memref<1x3x128xf32, #tpu.memory_space<vmem>>, vector<1x1x128xf32>
    tpu.vector_store %arg3[%c0_28, %c1_29, %c0_30], %49 {strides = array<i32>} : memref<1x3x128xf32, #tpu.memory_space<vmem>>, vector<1x1x128xf32>,
    %cst_31 = arith.constant 2.720000e-01 : f32
    %51 = vector.broadcast %cst_31 : f32 to vector<8x128xf32>
    %52 = arith.mulf %51, %4 : vector<8x128xf32>
    %cst_32 = arith.constant 5.340000e-01 : f32
    %53 = vector.broadcast %cst_32 : f32 to vector<8x128xf32>
    %54 = arith.mulf %53, %6 : vector<8x128xf32>
    %55 = arith.addf %52, %54 : vector<8x128xf32>
    %cst_33 = arith.constant 1.310000e-01 : f32
    %56 = vector.broadcast %cst_33 : f32 to vector<8x128xf32>
    %57 = arith.mulf %56, %8 : vector<8x128xf32>
    %58 = arith.addf %55, %57 : vector<8x128xf32>
    %cst_34 = arith.constant 0xFF800000 : f32
    %59 = vector.broadcast %cst_34 : f32 to vector<8x128xf32>
    %60 = arith.select %18, %58, %59 : vector<8x128xi1>, vector<8x128xf32>
    %cst_35 = arith.constant dense<0xFF800000> : vector<128xf32>
    %61 = vector.multi_reduction <maximumf>, %60, %cst_35 [0] : vector<8x128xf32> to vector<128xf32>
    %62 = vector.shape_cast %61 : vector<128xf32> to vector<1x128xf32>
    %c0_36 = arith.constant 0 : index
    %c2_37 = arith.constant 2 : index
    %c0_38 = arith.constant 0 : index
    %63 = vector.load %arg3[%c0_36, %c2_37, %c0_38] : memref<1x3x128xf32, #tpu.memory_space<vmem>>, vector<1x1x128xf32>
    %64 = vector.shape_cast %62 : vector<1x128xf32> to vector<1x1x128xf32>
    %65 = arith.maximumf %63, %64 : vector<1x1x128xf32>
    %c0_39 = arith.constant 0 : index
    %c2_40 = arith.constant 2 : index
    %c0_41 = arith.constant 0 : index
    %66 = vector.load %arg3[%c0_39, %c2_40, %c0_41] : memref<1x3x128xf32, #tpu.memory_space<vmem>>, vector<1x1x128xf32>
    tpu.vector_store %arg3[%c0_39, %c2_40, %c0_41], %65 {strides = array<i32>} : memref<1x3x128xf32, #tpu.memory_space<vmem>>, vector<1x1x128xf32>,
    %c0_i32_42 = arith.constant 0 : i32
    %67 = arith.cmpi eq, %arg1, %c0_i32_42 : i32
    %68 = arith.extui %67 : i1 to i32
    %c0_i32_43 = arith.constant 0 : i32
    %69 = arith.cmpi ne, %68, %c0_i32_43 : i32
    scf.if %69 {
      %c0_44 = arith.constant 0 : index
      %c0_45 = arith.constant 0 : index
      %c0_46 = arith.constant 0 : index
      %70 = vector.load %arg3[%c0_44, %c0_45, %c0_46] : memref<1x3x128xf32, #tpu.memory_space<vmem>>, vector<1x3x128xf32>
      %cst_47 = arith.constant dense<0xFF800000> : vector<1x3xf32>
      %71 = vector.multi_reduction <maximumf>, %70, %cst_47 [2] : vector<1x3x128xf32> to vector<1x3xf32>
      %72 = vector.shape_cast %71 : vector<1x3xf32> to vector<1x3x1xf32>
      %73 = vector.shape_cast %72 : vector<1x3x1xf32> to vector<1x3x1xf32>
      %74 = vector.broadcast %73 : vector<1x3x1xf32> to vector<1x3x128xf32>
      %c0_48 = arith.constant 0 : index
      %c0_49 = arith.constant 0 : index
      %c0_50 = arith.constant 0 : index
      %75 = vector.load %arg3[%c0_48, %c0_49, %c0_50] : memref<1x3x128xf32, #tpu.memory_space<vmem>>, vector<1x3x128xf32>
      tpu.vector_store %arg3[%c0_48, %c0_49, %c0_50], %74 {strides = array<i32>} : memref<1x3x128xf32, #tpu.memory_space<vmem>>, vector<1x3x128xf32>,
    } else {
    }
    return
  }
  func.func @transform_0(%arg0: i32, %arg1: i32) -> (i32, i32, i32, i32) {
    %c0_i32 = arith.constant 0 : i32
    %c0_i32_0 = arith.constant 0 : i32
    %c0_i32_1 = arith.constant 0 : i32
    return %arg0, %c0_i32, %arg1, %c0_i32_0 : i32, i32, i32, i32
  }
  func.func @transform_1(%arg0: i32, %arg1: i32) -> (i32, i32, i32) {
    %c0_i32 = arith.constant 0 : i32
    %c0_i32_0 = arith.constant 0 : i32
    %c0_i32_1 = arith.constant 0 : i32
    return %arg0, %c0_i32, %c0_i32_0 : i32, i32, i32
  }
}

</mosaic_0001>

<llo_original>
// kernel: tpu_custom_call.1
$region0: #{tpu_custom_call.1}
  #allocation0 [shape = 'u32[]', space=smem, size = 0x4, offset = 0x4, fixed_abs, tag = 'smem constant byte address 0x4 - core index']
  #allocation1 [shape = 'u32[144,128]{1,0:T(1,128)}', space=vmem, size = 0x12000, scoped, tag = 'internal scratch']
  %s0 = inlined_call_operand.hbm [shape: f32[2,3,8,128], index: 0, kind: input, shape index: {}]
  %s1 = inlined_call_operand.vmem [shape: f32[2,3,128], index: 1, kind: output, shape index: {}]
  %s2 = sld [smem:[#allocation0]]
  $region49: #{tpu_custom_call.1} parent=0
    _
  %s4 = ssub.s32 1, %s2
  %s5 = scalar_select 0, %s4, %s2
  $region1: #{tpu_custom_call.1} parent=0
    #allocation2 [shape = 'u8[24576]{0}', space=vmem, size = 0x6000, scoped, tag = 'input window, operand 0']
    #allocation3 [shape = 's32[2]{0}', space=sflag, size = 0x8, scoped, tag = 'scoped memory for tpu_custom_call.1']
    %6 = vsyncpa [#allocation3], 0
    %s7 = scalar_lea.sflag [#allocation3], 1
    %8 = vsyncpa %s7, 0
    loop: start=0, step=1, limit=4
    $region2: #{tpu_custom_call.1} parent=1 // loop_pre_header
      _
    $region3: #{tpu_custom_call.1} parent=1 // loop_header
      %s10 = sphi 0, %s14
      %p11 = scmp.ge.s32.totalorder %s10, 4
      %s17 = sphi 0, %s29
      %s18 = sphi 0, %s25
      %s19 = sphi 0, %s17
      %s20 = sphi 0, %s18
      %s21 = sphi 0, %s19
      %s22 = sphi 0, %s20
      %s34 = sphi 0, %s36
      %s37 = sphi 0, %s34
      %s38 = sphi 0, %s37
      %s54 = sphi 0, %s38
      %s60 = sphi 0, %s62
      %s63 = sphi 0, %s60
      %s64 = sphi 0, %s63
      %s80 = sphi 0, %s64
    $region4: #{tpu_custom_call.1} parent=1 // loop_header_branch
      %13 = sbr.rel (%p11) target = $region8
    $region5: #{tpu_custom_call.1} parent=1 // loop_body
      %s15 = ssub.s32 %s10, 1
      %s16 = ssub.s32 %s10, 2
      %s23 = sadd.s32 1, %s18
      %p24 = scmp.ge.s32.totalorder %s23, 1
      %s25 = scalar_select %p24, 0, %s23
      %s26 = sadd.s32 1, %s17
      %s27 = scalar_select %p24, %s26, %s17
      %p28 = scmp.ge.s32.totalorder %s27, 2
      %s29 = scalar_select %p28, 0, %s27
      %s30 = ssub.s32 %s17, %s29
      %s31 = ssub.s32 %s18, %s25
      %s32 = sor.u32 %s30, %s31
      %p33 = scmp.eq.s32.totalorder %s32, 0
      %s35 = sadd.s32 %s34, 1
      %s36 = scalar_select %p33, %s34, %s35
      %p39 = pneg %p33
      %p40 = scmp.eq.s32.totalorder %s10, 1
      %p41 = por %p39, %p40
      %p42 = scmp.ne.s32.totalorder %s34, %s37
      %p43 = scmp.eq.s32.totalorder %s10, 0
      %p44 = por %p42, %p43
      %p45 = scmp.ne.s32.totalorder %s34, %s37
      %p46 = scmp.eq.s32.totalorder %s15, 1
      %p47 = por %p45, %p46
      %p48 = scmp.ne.s32.totalorder %s37, %s38
      %p49 = scmp.eq.s32.totalorder %s15, 0
      %p50 = por %p48, %p49
      %p51 = scmp.ne.s32.totalorder %s37, %s38
      %p52 = scmp.eq.s32.totalorder %s16, 1
      %p53 = por %p51, %p52
      %p55 = scmp.ne.s32.totalorder %s38, %s54
      %p56 = scmp.eq.s32.totalorder %s16, 0
      %p57 = por %p55, %p56
      %s58 = ssub.s32 %s17, %s29
      %p59 = scmp.eq.s32.totalorder %s58, 0
      %s61 = sadd.s32 %s60, 1
      %s62 = scalar_select %p59, %s60, %s61
      %p65 = pneg %p59
      %p66 = scmp.eq.s32.totalorder %s10, 1
      %p67 = por %p65, %p66
      %p68 = scmp.ne.s32.totalorder %s60, %s63
      %p69 = scmp.eq.s32.totalorder %s10, 0
      %p70 = por %p68, %p69
      %p71 = scmp.ne.s32.totalorder %s60, %s63
      %p72 = scmp.eq.s32.totalorder %s15, 1
      %p73 = por %p71, %p72
      %p74 = scmp.ne.s32.totalorder %s63, %s64
      %p75 = scmp.eq.s32.totalorder %s15, 0
      %p76 = por %p74, %p75
      %p77 = scmp.ne.s32.totalorder %s63, %s64
      %p78 = scmp.eq.s32.totalorder %s16, 1
      %p79 = por %p77, %p78
      %p81 = scmp.ne.s32.totalorder %s64, %s80
      %p82 = scmp.eq.s32.totalorder %s16, 0
      %p83 = por %p81, %p82
      %p84 = scmp.le.s32.totalorder 1, %s10
      %p85 = scmp.lt.s32.totalorder %s10, 3
      %p86 = pnand %p84, %p85
      %p87 = pneg %p86
      // Predicated region
      $region9: #{tpu_custom_call.1} parent=5 // pred_check
        _
      $region10: #{tpu_custom_call.1} parent=5 // pred_check_branch
        %89 = sbr.rel (%p86) target = $region12
      $region11: #{tpu_custom_call.1} parent=5 // pred_region
        %s90 = ssub.s32 %s10, 1
      $region12: #{tpu_custom_call.1} parent=5 // pred_fallthru
        _
      %p91 = scmp.lt.s32.totalorder %s10, 2
      // Predicated region
      $region13: #{tpu_custom_call.1} parent=5 // pred_check
        %p92 = pneg %p91
      $region14: #{tpu_custom_call.1} parent=5 // pred_check_branch
        %94 = sbr.rel (%p92) target = $region16
      $region15: #{tpu_custom_call.1} parent=5 // pred_region
        // Predicated region
        $region17: #{tpu_custom_call.1} parent=15 // pred_check
          %p95 = pneg %p44
        $region18: #{tpu_custom_call.1} parent=15 // pred_check_branch
          %97 = sbr.rel (%p95) target = $region20
        $region19: #{tpu_custom_call.1} parent=15 // pred_region
          %s98 = sand.u32 %s34, 1
          %s99 = scalar_lea.sflag [#allocation3], %s98
          %s100 = sand.u32 %s34, 1
          %s101 = smul.addr %s100, 24
          %s102 = scalar_lea.vmem [#allocation2], %s101
          %s104 = ssub.s32 384, 384
          %105 = vsyncadd %s99, %s104
          %s106 = smul.addr %s17, 3
          %s107 = sadd.s32 %s18, %s106
          %s108 = smul.addr %s107, 128
          %s109 = scalar_lea.hbm %s0, %s108
          %s110 = sshll.u32 %s102, 4
          %s111 = int_to_ptr.vmem [resolvable:$true] %s110
          %116 = dma.hbm_to_vmem [thread:$0]  %s109, 384, %s111, %s99, 128, 128, 8
        $region20: #{tpu_custom_call.1} parent=15 // pred_fallthru
          _
      $region16: #{tpu_custom_call.1} parent=5 // pred_fallthru
        _
      %p117 = scmp.le.s32.totalorder 1, %s10
      %p118 = scmp.lt.s32.totalorder %s10, 3
      %p119 = pnand %p117, %p118
      %p120 = pneg %p119
      // Predicated region
      $region21: #{tpu_custom_call.1} parent=5 // pred_check
        _
      $region22: #{tpu_custom_call.1} parent=5 // pred_check_branch
        %122 = sbr.rel (%p119) target = $region24
      $region23: #{tpu_custom_call.1} parent=5 // pred_region
        %s123 = ssub.s32 %s10, 1
        %s124 = sand.u32 %s37, 1
        %s125 = scalar_lea.sflag [#allocation3], %s124
        %s126 = sand.u32 %s37, 1
        %s127 = smul.addr %s126, 24
        %s128 = scalar_lea.vmem [#allocation2], %s127
        // Predicated region
        $region25: #{tpu_custom_call.1} parent=23 // pred_check
          %p129 = pneg %p50
        $region26: #{tpu_custom_call.1} parent=23 // pred_check_branch
          %131 = sbr.rel (%p129) target = $region28
        $region27: #{tpu_custom_call.1} parent=23 // pred_region
          %132 = dma.done %s125, 384
        $region28: #{tpu_custom_call.1} parent=23 // pred_fallthru
          _
        %s133 = sand.u32 %s37, 1
        %s134 = scalar_lea.sflag [#allocation3], %s133
        %s135 = sand.u32 %s37, 1
        %s136 = smul.addr %s135, 24
        %s137 = scalar_lea.vmem [#allocation2], %s136
        %p138 = pneg %p50
        %p139 = pneg %p47
        %p140 = pneg %p76
        %p141 = pneg %p73
        %p142 = scmp.lt.s32.totalorder %s19, 1
        %s143 = scalar_select %p142, %s19, 1
        %s144 = smul.addr %s143, 4
        %s145 = scalar_lea.vmem %s1, %s144
        %p146 = scmp.lt.s32.totalorder %s19, 1
        %s147 = scalar_select %p146, %s19, 1
        %s148 = smul.addr %s147, 4
        %s149 = scalar_lea.vmem %s1, %s148
        %p150 = scmp.eq.s32.totalorder %s20, 0
        // Predicated region
        $region29: #{tpu_custom_call.1} parent=23 // pred_check
          %p151 = pneg %p150
        $region30: #{tpu_custom_call.1} parent=23 // pred_check_branch
          %153 = sbr.rel (%p151) target = $region32
        $region31: #{tpu_custom_call.1} parent=23 // pred_region
          %154 = vst [vmem:[%s149] sm:$0x7] -inf
        $region32: #{tpu_custom_call.1} parent=23 // pred_fallthru
          _
        %v155 = vld [vmem:[%s128] sm:$0xff]
        %s156 = scalar_lea.vmem %s128, 8 [#allocation2]
        %v157 = vld [vmem:[%s156] sm:$0xff]
        %s158 = scalar_lea.vmem %s128, 16 [#allocation2]
        %v159 = vld [vmem:[%s158] sm:$0xff]
        %v160 = vlaneseq
        %v161 = vshrl.u32 %v160, 7
        %v162 = vlaneseq
        %v163 = vand.u32 %v162, 127
        %s164 = smul.u32 %s20, 8
        %v165 = vstv %s164
        %v166 = vadd.s32 %v165, %v161
        %v167 = vmul.u32 %v166, 128
        %v168 = vadd.s32 %v167, %v163
        %vm169 = vcmp.lt.s32.totalorder %v168, 256
        %v170 = vmul.f32 %v155, 0.393
        %v171 = vmul.f32 %v157, 0.769
        %v172 = vadd.f32 %v170, %v171
        %v173 = vmul.f32 %v159, 0.189
        %v174 = vadd.f32 %v172, %v173
        %v175 = vsel %vm169, %v174, -inf
        %v176 = vrot.slane %v175, 4
        %v177 = vmax.f32 %v175, %v176
        %v178 = vrot.slane %v177, 2
        %v179 = vmax.f32 %v177, %v178
        %v180 = vrot.slane %v179, 1
        %v181 = vmax.f32 %v179, %v180
        %v182 = vld [vmem:[%s149] sm:$0x1]
        %v183 = vmax.f32 %v182, %v181
        %184 = vst [vmem:[%s149] sm:$0x1] %v183
        %v185 = vmul.f32 %v155, 0.349
        %v186 = vmul.f32 %v157, 0.686
        %v187 = vadd.f32 %v185, %v186
        %v188 = vmul.f32 %v159, 0.168
        %v189 = vadd.f32 %v187, %v188
        %v190 = vsel %vm169, %v189, -inf
        %v191 = vrot.slane %v190, 4
        %v192 = vmax.f32 %v190, %v191
        %v193 = vrot.slane %v192, 2
        %v194 = vmax.f32 %v192, %v193
        %v195 = vrot.slane %v194, 1
        %v196 = vmax.f32 %v194, %v195
        %v197 = vld [vmem:[%s149 + $0x1] sm:$0x1]
        %v198 = vmax.f32 %v197, %v196
        %199 = vst [vmem:[%s149 + $0x1] sm:$0x1] %v198
        %v200 = vmul.f32 %v155, 0.272
        %v201 = vmul.f32 %v157, 0.534
        %v202 = vadd.f32 %v200, %v201
        %v203 = vmul.f32 %v159, 0.131
        %v204 = vadd.f32 %v202, %v203
        %v205 = vsel %vm169, %v204, -inf
        %v206 = vrot.slane %v205, 4
        %v207 = vmax.f32 %v205, %v206
        %v208 = vrot.slane %v207, 2
        %v209 = vmax.f32 %v207, %v208
        %v210 = vrot.slane %v209, 1
        %v211 = vmax.f32 %v209, %v210
        %v212 = vld [vmem:[%s149 + $0x2] sm:$0x1]
        %v213 = vmax.f32 %v212, %v211
        %214 = vst [vmem:[%s149 + $0x2] sm:$0x1] %v213
        // Predicated region
        $region33: #{tpu_custom_call.1} parent=23 // pred_check
          %p215 = pneg %p150
        $region34: #{tpu_custom_call.1} parent=23 // pred_check_branch
          %217 = sbr.rel (%p215) target = $region36
        $region35: #{tpu_custom_call.1} parent=23 // pred_region
          %v218 = vld [vmem:[%s149] sm:$0x7]
          %vm219 = vcmask 1042432
          %v220 = vsel %vm219, %v218, -inf
          %221 = vmax.xlane.f32.xlu0 %v220
          %v222 = vpop.xlane.xlu0 %221
          %223 = vst [vmem:[%s149] sm:$0x7] %v222
        $region36: #{tpu_custom_call.1} parent=23 // pred_fallthru
          _
        %p224 = scmp.lt.s32.totalorder %s19, 1
        %s225 = scalar_select %p224, %s19, 1
        %s226 = smul.addr %s225, 4
        %s227 = scalar_lea.vmem %s1, %s226
        // Predicated region
        $region37: #{tpu_custom_call.1} parent=23 // pred_check
          %p228 = pneg %p73
        $region38: #{tpu_custom_call.1} parent=23 // pred_check_branch
          %230 = sbr.rel (%p228) target = $region40
        $region39: #{tpu_custom_call.1} parent=23 // pred_region
          _
        $region40: #{tpu_custom_call.1} parent=23 // pred_fallthru
          _
      $region24: #{tpu_custom_call.1} parent=5 // pred_fallthru
        _
      %p231 = scmp.le.s32.totalorder 2, %s10
      // Predicated region
      $region41: #{tpu_custom_call.1} parent=5 // pred_check
        %p232 = pneg %p231
      $region42: #{tpu_custom_call.1} parent=5 // pred_check_branch
        %234 = sbr.rel (%p232) target = $region44
      $region43: #{tpu_custom_call.1} parent=5 // pred_region
        %s235 = ssub.s32 %s10, 2
        // Predicated region
        $region45: #{tpu_custom_call.1} parent=43 // pred_check
          %p236 = pneg %p79
        $region46: #{tpu_custom_call.1} parent=43 // pred_check_branch
          %238 = sbr.rel (%p236) target = $region48
        $region47: #{tpu_custom_call.1} parent=43 // pred_region
          %p239 = scmp.lt.s32.totalorder %s21, 1
          %s240 = scalar_select %p239, %s21, 1
          %s241 = smul.addr %s240, 4
          %s242 = scalar_lea.vmem %s1, %s241
        $region48: #{tpu_custom_call.1} parent=43 // pred_fallthru
          _
      $region44: #{tpu_custom_call.1} parent=5 // pred_fallthru
        _
    $region6: #{tpu_custom_call.1} parent=1 // loop_footer
      %s14 = sadd.s32 1, %s10
    $region7: #{tpu_custom_call.1} parent=1 // loop_footer_branch
      %9 = sbr.rel target = $region3
    $region8: #{tpu_custom_call.1} parent=1 // loop_exit
      _
    %243 = vsyncpa [#allocation3], 1
    %s244 = scalar_lea.sflag [#allocation3], 1
    %245 = vsyncpa %s244, 1

</llo_original>
